<compile_context>
chip_gen: v5e
topology: v5e:2x2
jax: 0.10.0
libtpu: 0.0.40
codegen_flags: <defaults>
</compile_context>

<pallas_src>
import functools

import jax
import jax.numpy as jnp
from jax.experimental import pallas as pl
from jax.experimental.pallas import tpu as pltpu

EPS = 1e-5
NEG_SLOPE = 0.01  # F.leaky_relu default

_LANE = 128
_SUBLANE = 8
_VMEM_BUDGET = 40 * 1024 * 1024   # tile-sizing budget (fits v7x's 64 MiB/TC)
_VMEM_LIMIT = 48 * 1024 * 1024    # explicit scoped-VMEM limit for the compiler


def _round_up(x, m):
    return ((x + m - 1) // m) * m


def _pick_tm(m, k_pad, oc_pad, tm_req):
    """Pick an M-tile (multiple of 8) that fits the VMEM budget."""
    tm = min(tm_req, _round_up(m, _SUBLANE))
    tm = max(_SUBLANE, (tm // _SUBLANE) * _SUBLANE)

    def vmem_bytes(t):
        # double-buffered: P tile (bf16) + conv tile (f32, pass-1 out / pass-2
        # in+out) + tiny stat tiles; plus resident weight + slack.
        per_step = t * k_pad * 2 + 2 * t * oc_pad * 4 + 2 * _SUBLANE * oc_pad * 4
        return 2 * per_step + k_pad * oc_pad * 2 + (2 << 20)

    while tm > _SUBLANE and vmem_bytes(tm) > _VMEM_BUDGET:
        tm = max(_SUBLANE, (tm // 2 // _SUBLANE) * _SUBLANE)
    return tm


# ----------------------------- Pallas kernels ------------------------------ #

def _conv_stats_kernel(p_ref, w_ref, conv_ref, sum_ref, sqsum_ref):
    """Pass 1: conv tile on the MXU + per-tile partial BN statistics."""
    # [TM, Kp] (bf16) @ [Kp, OCp] (bf16) -> f32 accumulation.
    conv = jnp.dot(p_ref[...], w_ref[...], preferred_element_type=jnp.float32)
    conv_ref[...] = conv
    # Per-tile partial sums (zero-padded rows contribute 0, so they are
    # harmless; the wrapper divides by the true M).
    s = jnp.sum(conv, axis=0, keepdims=True)            # [1, OCp]
    sq = jnp.sum(conv * conv, axis=0, keepdims=True)    # [1, OCp]
    # Stats blocks are (1, 8, OCp) to keep the last two dims (8, 128)-aligned;
    # replicate across the 8 sublanes.
    sum_ref[...] = jnp.broadcast_to(s[None], sum_ref.shape)
    sqsum_ref[...] = jnp.broadcast_to(sq[None], sqsum_ref.shape)


def _bn_leaky_kernel(conv_ref, scale_ref, shift_ref, o_ref):
    """Pass 2: y = conv * scale + shift, then LeakyReLU. Pure VPU epilogue."""
    y = conv_ref[...] * scale_ref[...] + shift_ref[...]
    o_ref[...] = jnp.where(y >= 0, y, NEG_SLOPE * y).astype(o_ref.dtype)


# ------------------------------- host-side --------------------------------- #

def _im2col_nchw(x, kh, kw, stride, padding, dilation):
    """im2col with feature ordering (ic, kh, kw) to match torch weight layout."""
    n, c, h, w = x.shape
    xp = jnp.pad(x, ((0, 0), (0, 0), (padding, padding), (padding, padding)))
    oh = (h + 2 * padding - dilation * (kh - 1) - 1) // stride + 1
    ow = (w + 2 * padding - dilation * (kw - 1) - 1) // stride + 1
    cols = []
    for i in range(kh):
        for j in range(kw):
            hi = i * dilation
            wj = j * dilation
            patch = xp[:, :,
                       hi:hi + stride * (oh - 1) + 1:stride,
                       wj:wj + stride * (ow - 1) + 1:stride]  # [N, C, OH, OW]
            cols.append(patch)
    # [N, C, KH*KW, OH, OW] -> feature axis order (c, kh, kw)
    cols = jnp.stack(cols, axis=2).reshape(n, c * kh * kw, oh, ow)
    patches = cols.transpose(0, 2, 3, 1).reshape(n * oh * ow, c * kh * kw)
    return patches, oh, ow


@functools.partial(
    jax.jit,
    static_argnames=("kernel_size", "stride", "padding", "dilation", "tm"))
def bn_conv2d_leaky(x, weight, gamma, beta, *, kernel_size, stride, padding,
                    dilation=1, tm=512):
    """Forward pass of BN_Conv2d_Leaky.

    x:      [N, IC, H, W]     (NCHW)
    weight: [OC, IC, KH, KW]  (torch Conv2d layout, bias=False)
    gamma:  [OC]  BN weight
    beta:   [OC]  BN bias
    """
    # TODO(synk): groups > 1 not implemented (module default groups=1 covered).
    # TODO(synk): im2col is still materialized in HBM (KH*KW read amplification);
    #             an implicit-GEMM with a (kh, kw) reduction grid axis would
    #             remove it. BN running_mean/var momentum update not modeled.
    n, ic, _, _ = x.shape
    oc, ic_w, kh, kw = weight.shape
    assert ic == ic_w and kh == kernel_size and kw == kernel_size

    patches, oh, ow = _im2col_nchw(x, kh, kw, stride, padding, dilation)
    m, k = patches.shape
    k_pad = _round_up(k, _LANE)
    oc_pad = _round_up(oc, _LANE)
    tm = _pick_tm(m, k_pad, oc_pad, tm)
    n_tiles = pl.cdiv(m, tm)
    m_pad = n_tiles * tm

    # Lane/sublane-friendly padding; feed the MXU in bf16 (f32 accumulation).
    p_mat = jnp.pad(patches, ((0, m_pad - m), (0, k_pad - k))).astype(jnp.bfloat16)
    w_mat = jnp.pad(weight.reshape(oc, k).T.astype(jnp.float32),
                    ((0, k_pad - k), (0, oc_pad - oc))).astype(jnp.bfloat16)
    gamma_p = jnp.pad(gamma.astype(jnp.float32), (0, oc_pad - oc))
    beta_p = jnp.pad(beta.astype(jnp.float32), (0, oc_pad - oc))

    # ---- Pass 1: tiled conv matmul + per-tile partial BN statistics ----
    conv, psum, psq = pl.pallas_call(
        _conv_stats_kernel,
        out_shape=(
            jax.ShapeDtypeStruct((m_pad, oc_pad), jnp.float32),
            jax.ShapeDtypeStruct((n_tiles, _SUBLANE, oc_pad), jnp.float32),
            jax.ShapeDtypeStruct((n_tiles, _SUBLANE, oc_pad), jnp.float32),
        ),
        grid=(n_tiles,),
        in_specs=[
            pl.BlockSpec((tm, k_pad), lambda i: (i, 0)),
            pl.BlockSpec((k_pad, oc_pad), lambda i: (0, 0)),
        ],
        out_specs=(
            pl.BlockSpec((tm, oc_pad), lambda i: (i, 0)),
            pl.BlockSpec((1, _SUBLANE, oc_pad), lambda i: (i, 0, 0)),
            pl.BlockSpec((1, _SUBLANE, oc_pad), lambda i: (i, 0, 0)),
        ),
        compiler_params=pltpu.CompilerParams(
            dimension_semantics=("parallel",),
            vmem_limit_bytes=_VMEM_LIMIT),
    )(p_mat, w_mat)

    # Finish BN stats on the tiny [n_tiles, OCp] partials (rows replicated
    # across sublanes -> take row 0). Training-mode biased variance, f32 sums.
    total = jnp.sum(psum[:, 0, :], axis=0)
    total_sq = jnp.sum(psq[:, 0, :], axis=0)
    mean = total / m
    var = jnp.maximum(total_sq / m - mean * mean, 0.0)
    inv_std = jax.lax.rsqrt(var + EPS)
    scale = (gamma_p * inv_std).reshape(1, oc_pad)
    shift = (beta_p - mean * gamma_p * inv_std).reshape(1, oc_pad)

    # ---- Pass 2: tiled normalize + LeakyReLU ----
    out = pl.pallas_call(
        _bn_leaky_kernel,
        out_shape=jax.ShapeDtypeStruct((m_pad, oc_pad), jnp.float32),
        grid=(n_tiles,),
        in_specs=[
            pl.BlockSpec((tm, oc_pad), lambda i: (i, 0)),
            pl.BlockSpec((1, oc_pad), lambda i: (0, 0)),
            pl.BlockSpec((1, oc_pad), lambda i: (0, 0)),
        ],
        out_specs=pl.BlockSpec((tm, oc_pad), lambda i: (i, 0)),
        compiler_params=pltpu.CompilerParams(
            dimension_semantics=("parallel",),
            vmem_limit_bytes=_VMEM_LIMIT),
    )(conv, scale, shift)

    # [M, OC] (NHWC rows) -> NCHW for interface fidelity with the PyTorch module.
    return out[:m, :oc].reshape(n, oh, ow, oc).transpose(0, 3, 1, 2)


def _reference(x, weight, gamma, beta, stride, padding, dilation):
    """Pure-JAX reference (f32 conv + training-mode BN + LeakyReLU)."""
    conv = jax.lax.conv_general_dilated(
        x, weight, window_strides=(stride, stride),
        padding=[(padding, padding), (padding, padding)],
        rhs_dilation=(dilation, dilation),
        dimension_numbers=("NCHW", "OIHW", "NCHW"))
    mean = conv.mean(axis=(0, 2, 3), keepdims=True)
    var = conv.var(axis=(0, 2, 3), keepdims=True)  # biased
    y = ((conv - mean) * jax.lax.rsqrt(var + EPS)
         * gamma.reshape(1, -1, 1, 1) + beta.reshape(1, -1, 1, 1))
    return jnp.where(y >= 0, y, NEG_SLOPE * y)


if __name__ == "__main__":
    # BN_Conv2d_Leaky(in_channels=4, out_channels=8, kernel_size=3, stride=1, padding=1)
    N, IC, H, W = 2, 4, 16, 16
    OC, KS, STRIDE, PAD = 8, 3, 1, 1

    key = jax.random.PRNGKey(0)
    kx, kwgt = jax.random.split(key)
    x = jax.random.normal(kx, (N, IC, H, W), dtype=jnp.float32)
    weight = jax.random.normal(kwgt, (OC, IC, KS, KS), dtype=jnp.float32) * 0.1
    gamma = jnp.ones((OC,), dtype=jnp.float32)   # nn.BatchNorm2d default init
    beta = jnp.zeros((OC,), dtype=jnp.float32)

    # tm=128 so the toy shape (M = 2*16*16 = 512) exercises a multi-tile grid.
    y = bn_conv2d_leaky(x, weight, gamma, beta,
                        kernel_size=KS, stride=STRIDE, padding=PAD, tm=128)
    jax.block_until_ready(y)
    assert y.shape == (N, OC, H, W)

    # Sanity check vs. f32 reference (bf16 MXU inputs -> relaxed tolerance).
    y_ref = _reference(x, weight, gamma, beta, STRIDE, PAD, 1)
    err = float(jnp.max(jnp.abs(y - y_ref)))
    assert err < 1e-1, f"max abs err {err}"
    print("KERNEL_OK")
</pallas_src>

<mosaic_0001>
module attributes {stable_mosaic.version = 11 : i64} {
  func.func @_conv_stats_kernel(%arg0: i32, %arg1: memref<128x128xbf16, #tpu.memory_space<vmem>>, %arg2: memref<128x128xbf16, #tpu.memory_space<vmem>>, %arg3: memref<128x128xf32, #tpu.memory_space<vmem>>, %arg4: memref<1x8x128xf32, #tpu.memory_space<vmem>>, %arg5: memref<1x8x128xf32, #tpu.memory_space<vmem>>) attributes {dimension_semantics = [#tpu.dimension_semantics<parallel>], iteration_bounds = array<i64: 4>, scalar_prefetch = 0 : i64, scratch_operands = 0 : i64, tpu.core_type = #tpu.core_type<tc>, window_params = [{transform_indices = @transform_0, window_bounds = array<i64: 128, 128>}, {pipeline_mode = #tpu.pipeline_mode<synchronous>, transform_indices = @transform_1, window_bounds = array<i64: 128, 128>}, {transform_indices = @transform_2, window_bounds = array<i64: 128, 128>}, {transform_indices = @transform_3, window_bounds = array<i64: 1, 8, 128>}, {transform_indices = @transform_4, window_bounds = array<i64: 1, 8, 128>}]} {
    %c0 = arith.constant 0 : index
    %c0_0 = arith.constant 0 : index
    %0 = vector.load %arg1[%c0, %c0_0] : memref<128x128xbf16, #tpu.memory_space<vmem>>, vector<128x128xbf16>
    %c0_1 = arith.constant 0 : index
    %c0_2 = arith.constant 0 : index
    %1 = vector.load %arg2[%c0_1, %c0_2] : memref<128x128xbf16, #tpu.memory_space<vmem>>, vector<128x128xbf16>
    %cst = arith.constant dense<0.000000e+00> : vector<128x128xf32>
    %2 = tpu.matmul %0, %1, %cst {dimension_numbers = #tpu.dot_dimension_numbers<[1], [0], [0], [1], [0, 0, 1, 1], [], []>} : vector<128x128xbf16>, vector<128x128xbf16>, vector<128x128xf32> -> vector<128x128xf32>
    %c0_3 = arith.constant 0 : index
    %c0_4 = arith.constant 0 : index
    %3 = vector.load %arg3[%c0_3, %c0_4] : memref<128x128xf32, #tpu.memory_space<vmem>>, vector<128x128xf32>
    tpu.vector_store %arg3[%c0_3, %c0_4], %2 {strides = array<i32>} : memref<128x128xf32, #tpu.memory_space<vmem>>, vector<128x128xf32>,
    %cst_5 = arith.constant dense<0.000000e+00> : vector<128xf32>
    %4 = vector.multi_reduction <add>, %2, %cst_5 [0] : vector<128x128xf32> to vector<128xf32>
    %5 = vector.shape_cast %4 : vector<128xf32> to vector<1x128xf32>
    %6 = arith.mulf %2, %2 : vector<128x128xf32>
    %cst_6 = arith.constant dense<0.000000e+00> : vector<128xf32>
    %7 = vector.multi_reduction <add>, %6, %cst_6 [0] : vector<128x128xf32> to vector<128xf32>
    %8 = vector.shape_cast %7 : vector<128xf32> to vector<1x128xf32>
    %9 = vector.shape_cast %5 : vector<1x128xf32> to vector<1x1x128xf32>
    %10 = vector.shape_cast %9 : vector<1x1x128xf32> to vector<1x1x128xf32>
    %11 = vector.broadcast %10 : vector<1x1x128xf32> to vector<1x8x128xf32>
    %c0_7 = arith.constant 0 : index
    %c0_8 = arith.constant 0 : index
    %c0_9 = arith.constant 0 : index
    %12 = vector.load %arg4[%c0_7, %c0_8, %c0_9] : memref<1x8x128xf32, #tpu.memory_space<vmem>>, vector<1x8x128xf32>
    tpu.vector_store %arg4[%c0_7, %c0_8, %c0_9], %11 {strides = array<i32>} : memref<1x8x128xf32, #tpu.memory_space<vmem>>, vector<1x8x128xf32>,
    %13 = vector.shape_cast %8 : vector<1x128xf32> to vector<1x1x128xf32>
    %14 = vector.shape_cast %13 : vector<1x1x128xf32> to vector<1x1x128xf32>
    %15 = vector.broadcast %14 : vector<1x1x128xf32> to vector<1x8x128xf32>
    %c0_10 = arith.constant 0 : index
    %c0_11 = arith.constant 0 : index
    %c0_12 = arith.constant 0 : index
    %16 = vector.load %arg5[%c0_10, %c0_11, %c0_12] : memref<1x8x128xf32, #tpu.memory_space<vmem>>, vector<1x8x128xf32>
    tpu.vector_store %arg5[%c0_10, %c0_11, %c0_12], %15 {strides = array<i32>} : memref<1x8x128xf32, #tpu.memory_space<vmem>>, vector<1x8x128xf32>,
    return
  }
  func.func @transform_0(%arg0: i32) -> (i32, i32) {
    %c0_i32 = arith.constant 0 : i32
    %c0_i32_0 = arith.constant 0 : i32
    return %arg0, %c0_i32 : i32, i32
  }
  func.func @transform_1(%arg0: i32) -> (i32, i32) {
    %c0_i32 = arith.constant 0 : i32
    %c0_i32_0 = arith.constant 0 : i32
    %c0_i32_1 = arith.constant 0 : i32
    return %c0_i32, %c0_i32_0 : i32, i32
  }
  func.func @transform_2(%arg0: i32) -> (i32, i32) {
    %c0_i32 = arith.constant 0 : i32
    %c0_i32_0 = arith.constant 0 : i32
    return %arg0, %c0_i32 : i32, i32
  }
  func.func @transform_3(%arg0: i32) -> (i32, i32, i32) {
    %c0_i32 = arith.constant 0 : i32
    %c0_i32_0 = arith.constant 0 : i32
    %c0_i32_1 = arith.constant 0 : i32
    return %arg0, %c0_i32, %c0_i32_0 : i32, i32, i32
  }
  func.func @transform_4(%arg0: i32) -> (i32, i32, i32) {
    %c0_i32 = arith.constant 0 : i32
    %c0_i32_0 = arith.constant 0 : i32
    %c0_i32_1 = arith.constant 0 : i32
    return %arg0, %c0_i32, %c0_i32_0 : i32, i32, i32
  }
}

module attributes {stable_mosaic.version = 11 : i64} {
  func.func @_bn_leaky_kernel(%arg0: i32, %arg1: memref<128x128xf32, #tpu.memory_space<vmem>>, %arg2: memref<1x128xf32, #tpu.memory_space<vmem>>, %arg3: memref<1x128xf32, #tpu.memory_space<vmem>>, %arg4: memref<128x128xf32, #tpu.memory_space<vmem>>) attributes {dimension_semantics = [#tpu.dimension_semantics<parallel>], iteration_bounds = array<i64: 4>, scalar_prefetch = 0 : i64, scratch_operands = 0 : i64, tpu.core_type = #tpu.core_type<tc>, window_params = [{transform_indices = @transform_0, window_bounds = array<i64: 128, 128>}, {pipeline_mode = #tpu.pipeline_mode<synchronous>, transform_indices = @transform_1, window_bounds = array<i64: 1, 128>}, {pipeline_mode = #tpu.pipeline_mode<synchronous>, transform_indices = @transform_2, window_bounds = array<i64: 1, 128>}, {transform_indices = @transform_3, window_bounds = array<i64: 128, 128>}]} {
    %c0 = arith.constant 0 : index
    %c0_0 = arith.constant 0 : index
    %0 = vector.load %arg1[%c0, %c0_0] : memref<128x128xf32, #tpu.memory_space<vmem>>, vector<128x128xf32>
    %c0_1 = arith.constant 0 : index
    %c0_2 = arith.constant 0 : index
    %1 = vector.load %arg2[%c0_1, %c0_2] : memref<1x128xf32, #tpu.memory_space<vmem>>, vector<1x128xf32>
    %2 = vector.broadcast %1 : vector<1x128xf32> to vector<128x128xf32>
    %3 = arith.mulf %0, %2 : vector<128x128xf32>
    %c0_3 = arith.constant 0 : index
    %c0_4 = arith.constant 0 : index
    %4 = vector.load %arg3[%c0_3, %c0_4] : memref<1x128xf32, #tpu.memory_space<vmem>>, vector<1x128xf32>
    %5 = vector.broadcast %4 : vector<1x128xf32> to vector<128x128xf32>
    %6 = arith.addf %3, %5 : vector<128x128xf32>
    %cst = arith.constant 0.000000e+00 : f32
    %7 = vector.broadcast %cst : f32 to vector<128x128xf32>
    %8 = arith.cmpf oge, %6, %7 : vector<128x128xf32>
    %cst_5 = arith.constant 0.00999999977 : f32
    %9 = vector.broadcast %cst_5 : f32 to vector<128x128xf32>
    %10 = arith.mulf %9, %6 : vector<128x128xf32>
    %11 = arith.select %8, %6, %10 : vector<128x128xi1>, vector<128x128xf32>
    %c0_6 = arith.constant 0 : index
    %c0_7 = arith.constant 0 : index
    %12 = vector.load %arg4[%c0_6, %c0_7] : memref<128x128xf32, #tpu.memory_space<vmem>>, vector<128x128xf32>
    tpu.vector_store %arg4[%c0_6, %c0_7], %11 {strides = array<i32>} : memref<128x128xf32, #tpu.memory_space<vmem>>, vector<128x128xf32>,
    return
  }
  func.func @transform_0(%arg0: i32) -> (i32, i32) {
    %c0_i32 = arith.constant 0 : i32
    %c0_i32_0 = arith.constant 0 : i32
    return %arg0, %c0_i32 : i32, i32
  }
  func.func @transform_1(%arg0: i32) -> (i32, i32) {
    %c0_i32 = arith.constant 0 : i32
    %c0_i32_0 = arith.constant 0 : i32
    %c0_i32_1 = arith.constant 0 : i32
    return %c0_i32, %c0_i32_0 : i32, i32
  }
  func.func @transform_2(%arg0: i32) -> (i32, i32) {
    %c0_i32 = arith.constant 0 : i32
    %c0_i32_0 = arith.constant 0 : i32
    %c0_i32_1 = arith.constant 0 : i32
    return %c0_i32, %c0_i32_0 : i32, i32
  }
  func.func @transform_3(%arg0: i32) -> (i32, i32) {
    %c0_i32 = arith.constant 0 : i32
    %c0_i32_0 = arith.constant 0 : i32
    return %arg0, %c0_i32 : i32, i32
  }
}

</mosaic_0001>

<llo_original>
// kernel: bn_conv2d_leaky.3
$region0: #{bn_conv2d_leaky.3}
  #allocation0 [shape = 'u32[]', space=smem, size = 0x4, offset = 0x4, fixed_abs, tag = 'smem constant byte address 0x4 - core index']
  #allocation1 [shape = 'u32[72,128]{1,0:T(1,128)}', space=vmem, size = 0x9000, scoped, tag = 'internal scratch']
  %s0 = inlined_call_operand.vmem [shape: f32[512,128], index: 0, kind: input, shape index: {}]
  %s1 = inlined_call_operand.vmem [shape: f32[1,128], index: 1, kind: input, shape index: {}]
  %s2 = inlined_call_operand.vmem [shape: f32[1,128], index: 2, kind: input, shape index: {}]
  %s3 = inlined_call_operand.vmem [shape: f32[512,128], index: 3, kind: output, shape index: {}]
  %s4 = sld [smem:[#allocation0]]
  $region45: #{bn_conv2d_leaky.3} parent=0
    _
  %s6 = ssub.s32 1, %s4
  %s7 = scalar_select 0, %s6, %s4
  loop: start=0, step=1, limit=6
  $region2: #{bn_conv2d_leaky.3} parent=0 // loop_pre_header
    _
  $region3: #{bn_conv2d_leaky.3} parent=0 // loop_header
    %s9 = sphi 0, %s13
    %p10 = scmp.ge.s32.totalorder %s9, 6
    %s19 = sphi 0, %s21
    %s22 = sphi 0, %s19
    %s23 = sphi 0, %s22
    %s39 = sphi 0, %s23
    %s43 = sphi 0, %s43
    %s45 = sphi 0, %s43
    %s46 = sphi 0, %s45
    %s60 = sphi 0, %s46
    %s64 = sphi 0, %s64
    %s66 = sphi 0, %s64
    %s67 = sphi 0, %s66
    %s81 = sphi 0, %s67
    %s87 = sphi 0, %s89
    %s90 = sphi 0, %s87
    %s91 = sphi 0, %s90
    %s107 = sphi 0, %s91
  $region4: #{bn_conv2d_leaky.3} parent=0 // loop_header_branch
    %12 = sbr.rel (%p10) target = $region8
  $region5: #{bn_conv2d_leaky.3} parent=0 // loop_body
    %s14 = ssub.s32 %s9, 1
    %s15 = ssub.s32 %s9, 2
    %s16 = sadd.s32 %s9, 1
    %s17 = ssub.s32 %s9, %s16
    %p18 = scmp.eq.s32.totalorder %s17, 0
    %s20 = sadd.s32 %s19, 1
    %s21 = scalar_select %p18, %s19, %s20
    %p24 = pneg %p18
    %p25 = scmp.eq.s32.totalorder %s9, 3
    %p26 = por %p24, %p25
    %p27 = scmp.ne.s32.totalorder %s19, %s22
    %p28 = scmp.eq.s32.totalorder %s9, 0
    %p29 = por %p27, %p28
    %p30 = scmp.ne.s32.totalorder %s19, %s22
    %p31 = scmp.eq.s32.totalorder %s14, 3
    %p32 = por %p30, %p31
    %p33 = scmp.ne.s32.totalorder %s22, %s23
    %p34 = scmp.eq.s32.totalorder %s14, 0
    %p35 = por %p33, %p34
    %p36 = scmp.ne.s32.totalorder %s22, %s23
    %p37 = scmp.eq.s32.totalorder %s15, 3
    %p38 = por %p36, %p37
    %p40 = scmp.ne.s32.totalorder %s23, %s39
    %p41 = scmp.eq.s32.totalorder %s15, 0
    %p42 = por %p40, %p41
    %s44 = sadd.s32 %s43, 1
    %p47 = scmp.eq.s32.totalorder %s9, 3
    %p48 = scmp.ne.s32.totalorder %s43, %s45
    %p49 = scmp.eq.s32.totalorder %s9, 0
    %p50 = por %p48, %p49
    %p51 = scmp.ne.s32.totalorder %s43, %s45
    %p52 = scmp.eq.s32.totalorder %s14, 3
    %p53 = por %p51, %p52
    %p54 = scmp.ne.s32.totalorder %s45, %s46
    %p55 = scmp.eq.s32.totalorder %s14, 0
    %p56 = por %p54, %p55
    %p57 = scmp.ne.s32.totalorder %s45, %s46
    %p58 = scmp.eq.s32.totalorder %s15, 3
    %p59 = por %p57, %p58
    %p61 = scmp.ne.s32.totalorder %s46, %s60
    %p62 = scmp.eq.s32.totalorder %s15, 0
    %p63 = por %p61, %p62
    %s65 = sadd.s32 %s64, 1
    %p68 = scmp.eq.s32.totalorder %s9, 3
    %p69 = scmp.ne.s32.totalorder %s64, %s66
    %p70 = scmp.eq.s32.totalorder %s9, 0
    %p71 = por %p69, %p70
    %p72 = scmp.ne.s32.totalorder %s64, %s66
    %p73 = scmp.eq.s32.totalorder %s14, 3
    %p74 = por %p72, %p73
    %p75 = scmp.ne.s32.totalorder %s66, %s67
    %p76 = scmp.eq.s32.totalorder %s14, 0
    %p77 = por %p75, %p76
    %p78 = scmp.ne.s32.totalorder %s66, %s67
    %p79 = scmp.eq.s32.totalorder %s15, 3
    %p80 = por %p78, %p79
    %p82 = scmp.ne.s32.totalorder %s67, %s81
    %p83 = scmp.eq.s32.totalorder %s15, 0
    %p84 = por %p82, %p83
    %s85 = ssub.s32 %s9, %s16
    %p86 = scmp.eq.s32.totalorder %s85, 0
    %s88 = sadd.s32 %s87, 1
    %s89 = scalar_select %p86, %s87, %s88
    %p92 = pneg %p86
    %p93 = scmp.eq.s32.totalorder %s9, 3
    %p94 = por %p92, %p93
    %p95 = scmp.ne.s32.totalorder %s87, %s90
    %p96 = scmp.eq.s32.totalorder %s9, 0
    %p97 = por %p95, %p96
    %p98 = scmp.ne.s32.totalorder %s87, %s90
    %p99 = scmp.eq.s32.totalorder %s14, 3
    %p100 = por %p98, %p99
    %p101 = scmp.ne.s32.totalorder %s90, %s91
    %p102 = scmp.eq.s32.totalorder %s14, 0
    %p103 = por %p101, %p102
    %p104 = scmp.ne.s32.totalorder %s90, %s91
    %p105 = scmp.eq.s32.totalorder %s15, 3
    %p106 = por %p104, %p105
    %p108 = scmp.ne.s32.totalorder %s91, %s107
    %p109 = scmp.eq.s32.totalorder %s15, 0
    %p110 = por %p108, %p109
    %p111 = scmp.le.s32.totalorder 1, %s9
    %p112 = scmp.lt.s32.totalorder %s9, 5
    %p113 = pnand %p111, %p112
    %p114 = pneg %p113
    // Predicated region
    $region9: #{bn_conv2d_leaky.3} parent=5 // pred_check
      _
    $region10: #{bn_conv2d_leaky.3} parent=5 // pred_check_branch
      %116 = sbr.rel (%p113) target = $region12
    $region11: #{bn_conv2d_leaky.3} parent=5 // pred_region
      %s117 = ssub.s32 %s9, 1
      // Predicated region
      $region13: #{bn_conv2d_leaky.3} parent=11 // pred_check
        %p118 = pneg %p56
      $region14: #{bn_conv2d_leaky.3} parent=11 // pred_check_branch
        %120 = sbr.rel (%p118) target = $region16
      $region15: #{bn_conv2d_leaky.3} parent=11 // pred_region
        _
      $region16: #{bn_conv2d_leaky.3} parent=11 // pred_fallthru
        _
      // Predicated region
      $region17: #{bn_conv2d_leaky.3} parent=11 // pred_check
        %p121 = pneg %p77
      $region18: #{bn_conv2d_leaky.3} parent=11 // pred_check_branch
        %123 = sbr.rel (%p121) target = $region20
      $region19: #{bn_conv2d_leaky.3} parent=11 // pred_region
        _
      $region20: #{bn_conv2d_leaky.3} parent=11 // pred_fallthru
        _
    $region12: #{bn_conv2d_leaky.3} parent=5 // pred_fallthru
      _
    %p124 = scmp.lt.s32.totalorder %s9, 4
    // Predicated region
    $region21: #{bn_conv2d_leaky.3} parent=5 // pred_check
      %p125 = pneg %p124
    $region22: #{bn_conv2d_leaky.3} parent=5 // pred_check_branch
      %127 = sbr.rel (%p125) target = $region24
    $region23: #{bn_conv2d_leaky.3} parent=5 // pred_region
      // Predicated region
      $region25: #{bn_conv2d_leaky.3} parent=23 // pred_check
        %p128 = pneg %p29
      $region26: #{bn_conv2d_leaky.3} parent=23 // pred_check_branch
        %130 = sbr.rel (%p128) target = $region28
      $region27: #{bn_conv2d_leaky.3} parent=23 // pred_region
        %s131 = smul.u32 16, %s9
        %p132 = scmp.lt.s32.totalorder %s131, 63
        %s133 = scalar_select %p132, %s131, 63
        %s134 = smul.addr %s133, 8
        %s135 = scalar_lea.vmem %s0, %s134
        %s136 = smul.u32 16, %s9
      $region28: #{bn_conv2d_leaky.3} parent=23 // pred_fallthru
        _
    $region24: #{bn_conv2d_leaky.3} parent=5 // pred_fallthru
      _
    %p137 = scmp.le.s32.totalorder 1, %s9
    %p138 = scmp.lt.s32.totalorder %s9, 5
    %p139 = pnand %p137, %p138
    %p140 = pneg %p139
    // Predicated region
    $region29: #{bn_conv2d_leaky.3} parent=5 // pred_check
      _
    $region30: #{bn_conv2d_leaky.3} parent=5 // pred_check_branch
      %142 = sbr.rel (%p139) target = $region32
    $region31: #{bn_conv2d_leaky.3} parent=5 // pred_region
      %s143 = ssub.s32 %s9, 1
      %s144 = smul.u32 16, %s14
      %p145 = scmp.lt.s32.totalorder %s144, 63
      %s146 = scalar_select %p145, %s144, 63
      %s147 = smul.addr %s146, 8
      %s148 = scalar_lea.vmem %s0, %s147
      %p149 = pneg %p35
      %p150 = pneg %p32
      %p151 = pneg %p56
      %p152 = pneg %p53
      %p153 = pneg %p77
      %p154 = pneg %p74
      %p155 = pneg %p103
      %p156 = pneg %p100
      %s157 = smul.u32 16, %s14
      %p158 = scmp.lt.s32.totalorder %s157, 63
      %s159 = scalar_select %p158, %s157, 63
      %s160 = smul.addr %s159, 8
      %s161 = scalar_lea.vmem %s3, %s160
      %s162 = smul.u32 16, %s14
      %p163 = scmp.lt.s32.totalorder %s162, 63
      %s164 = scalar_select %p163, %s162, 63
      %s165 = smul.addr %s164, 8
      %s166 = scalar_lea.vmem %s0, %s165
      %s167 = smul.u32 16, %s14
      %s168 = smul.u32 16, %s14
      %p169 = scmp.lt.s32.totalorder %s168, 63
      %s170 = scalar_select %p169, %s168, 63
      %s171 = smul.addr %s170, 8
      %s172 = scalar_lea.vmem %s3, %s171
      %s173 = smul.u32 16, %s14
      %v174 = vld [vmem:[%s166] sm:$0xff]
      %v175 = vld [vmem:[%s166 + $0x8] sm:$0xff]
      %v176 = vld [vmem:[%s166 + $0x10] sm:$0xff]
      %v177 = vld [vmem:[%s166 + $0x18] sm:$0xff]
      %v178 = vld [vmem:[%s166 + $0x20] sm:$0xff]
      %v179 = vld [vmem:[%s166 + $0x28] sm:$0xff]
      %v180 = vld [vmem:[%s166 + $0x30] sm:$0xff]
      %v181 = vld [vmem:[%s166 + $0x38] sm:$0xff]
      %v182 = vld [vmem:[%s166 + $0x40] sm:$0xff]
      %v183 = vld [vmem:[%s166 + $0x48] sm:$0xff]
      %v184 = vld [vmem:[%s166 + $0x50] sm:$0xff]
      %v185 = vld [vmem:[%s166 + $0x58] sm:$0xff]
      %v186 = vld [vmem:[%s166 + $0x60] sm:$0xff]
      %v187 = vld [vmem:[%s166 + $0x68] sm:$0xff]
      %v188 = vld [vmem:[%s166 + $0x70] sm:$0xff]
      %v189 = vld [vmem:[%s166 + $0x78] sm:$0xff]
      %v190 = vld [vmem:[%s1] sm:$0x1]
      %v192 = vperm.slane %v190, 0
      %v194 = vmul.f32 %v174, %v192
      %v195 = vmul.f32 %v175, %v192
      %v196 = vmul.f32 %v176, %v192
      %v197 = vmul.f32 %v177, %v192
      %v198 = vmul.f32 %v178, %v192
      %v199 = vmul.f32 %v179, %v192
      %v200 = vmul.f32 %v180, %v192
      %v201 = vmul.f32 %v181, %v192
      %v202 = vmul.f32 %v182, %v192
      %v203 = vmul.f32 %v183, %v192
      %v204 = vmul.f32 %v184, %v192
      %v205 = vmul.f32 %v185, %v192
      %v206 = vmul.f32 %v186, %v192
      %v207 = vmul.f32 %v187, %v192
      %v208 = vmul.f32 %v188, %v192
      %v209 = vmul.f32 %v189, %v192
      %v210 = vld [vmem:[%s2] sm:$0x1]
      %v212 = vperm.slane %v210, 0
      %v214 = vadd.f32 %v194, %v212
      %v215 = vadd.f32 %v195, %v212
      %v216 = vadd.f32 %v196, %v212
      %v217 = vadd.f32 %v197, %v212
      %v218 = vadd.f32 %v198, %v212
      %v219 = vadd.f32 %v199, %v212
      %v220 = vadd.f32 %v200, %v212
      %v221 = vadd.f32 %v201, %v212
      %v222 = vadd.f32 %v202, %v212
      %v223 = vadd.f32 %v203, %v212
      %v224 = vadd.f32 %v204, %v212
      %v225 = vadd.f32 %v205, %v212
      %v226 = vadd.f32 %v206, %v212
      %v227 = vadd.f32 %v207, %v212
      %v228 = vadd.f32 %v208, %v212
      %v229 = vadd.f32 %v209, %v212
      %vm230 = vcmp.ge.f32.partialorder %v214, 0.0
      %vm231 = vcmp.ge.f32.partialorder %v215, 0.0
      %vm232 = vcmp.ge.f32.partialorder %v216, 0.0
      %vm233 = vcmp.ge.f32.partialorder %v217, 0.0
      %vm234 = vcmp.ge.f32.partialorder %v218, 0.0
      %vm235 = vcmp.ge.f32.partialorder %v219, 0.0
      %vm236 = vcmp.ge.f32.partialorder %v220, 0.0
      %vm237 = vcmp.ge.f32.partialorder %v221, 0.0
      %vm238 = vcmp.ge.f32.partialorder %v222, 0.0
      %vm239 = vcmp.ge.f32.partialorder %v223, 0.0
      %vm240 = vcmp.ge.f32.partialorder %v224, 0.0
      %vm241 = vcmp.ge.f32.partialorder %v225, 0.0
      %vm242 = vcmp.ge.f32.partialorder %v226, 0.0
      %vm243 = vcmp.ge.f32.partialorder %v227, 0.0
      %vm244 = vcmp.ge.f32.partialorder %v228, 0.0
      %vm245 = vcmp.ge.f32.partialorder %v229, 0.0
      %v246 = vmul.f32 %v214, 0.01
      %v247 = vmul.f32 %v215, 0.01
      %v248 = vmul.f32 %v216, 0.01
      %v249 = vmul.f32 %v217, 0.01
      %v250 = vmul.f32 %v218, 0.01
      %v251 = vmul.f32 %v219, 0.01
      %v252 = vmul.f32 %v220, 0.01
      %v253 = vmul.f32 %v221, 0.01
      %v254 = vmul.f32 %v222, 0.01
      %v255 = vmul.f32 %v223, 0.01
      %v256 = vmul.f32 %v224, 0.01
      %v257 = vmul.f32 %v225, 0.01
      %v258 = vmul.f32 %v226, 0.01
      %v259 = vmul.f32 %v227, 0.01
      %v260 = vmul.f32 %v228, 0.01
      %v261 = vmul.f32 %v229, 0.01
      %v262 = vsel %vm230, %v214, %v246
      %v263 = vsel %vm231, %v215, %v247
      %v264 = vsel %vm232, %v216, %v248
      %v265 = vsel %vm233, %v217, %v249
      %v266 = vsel %vm234, %v218, %v250
      %v267 = vsel %vm235, %v219, %v251
      %v268 = vsel %vm236, %v220, %v252
      %v269 = vsel %vm237, %v221, %v253
      %v270 = vsel %vm238, %v222, %v254
      %v271 = vsel %vm239, %v223, %v255
      %v272 = vsel %vm240, %v224, %v256
      %v273 = vsel %vm241, %v225, %v257
      %v274 = vsel %vm242, %v226, %v258
      %v275 = vsel %vm243, %v227, %v259
      %v276 = vsel %vm244, %v228, %v260
      %v277 = vsel %vm245, %v229, %v261
      %278 = vst [vmem:[%s172] sm:$0xff] %v262
      %279 = vst [vmem:[%s172 + $0x8] sm:$0xff] %v263
      %280 = vst [vmem:[%s172 + $0x10] sm:$0xff] %v264
      %281 = vst [vmem:[%s172 + $0x18] sm:$0xff] %v265
      %282 = vst [vmem:[%s172 + $0x20] sm:$0xff] %v266
      %283 = vst [vmem:[%s172 + $0x28] sm:$0xff] %v267
      %284 = vst [vmem:[%s172 + $0x30] sm:$0xff] %v268
      %285 = vst [vmem:[%s172 + $0x38] sm:$0xff] %v269
      %286 = vst [vmem:[%s172 + $0x40] sm:$0xff] %v270
      %287 = vst [vmem:[%s172 + $0x48] sm:$0xff] %v271
      %288 = vst [vmem:[%s172 + $0x50] sm:$0xff] %v272
      %289 = vst [vmem:[%s172 + $0x58] sm:$0xff] %v273
      %290 = vst [vmem:[%s172 + $0x60] sm:$0xff] %v274
      %291 = vst [vmem:[%s172 + $0x68] sm:$0xff] %v275
      %292 = vst [vmem:[%s172 + $0x70] sm:$0xff] %v276
      %293 = vst [vmem:[%s172 + $0x78] sm:$0xff] %v277
      %s294 = smul.u32 16, %s14
      %p295 = scmp.lt.s32.totalorder %s294, 63
      %s296 = scalar_select %p295, %s294, 63
      %s297 = smul.addr %s296, 8
      %s298 = scalar_lea.vmem %s3, %s297
      // Predicated region
      $region33: #{bn_conv2d_leaky.3} parent=31 // pred_check
        %p299 = pneg %p100
      $region34: #{bn_conv2d_leaky.3} parent=31 // pred_check_branch
        %301 = sbr.rel (%p299) target = $region36
      $region35: #{bn_conv2d_leaky.3} parent=31 // pred_region
        %s302 = smul.u32 16, %s14
      $region36: #{bn_conv2d_leaky.3} parent=31 // pred_fallthru
        _
    $region32: #{bn_conv2d_leaky.3} parent=5 // pred_fallthru
      _
    %p303 = scmp.le.s32.totalorder 2, %s9
    // Predicated region
    $region37: #{bn_conv2d_leaky.3} parent=5 // pred_check
      %p304 = pneg %p303
    $region38: #{bn_conv2d_leaky.3} parent=5 // pred_check_branch
      %306 = sbr.rel (%p304) target = $region40
    $region39: #{bn_conv2d_leaky.3} parent=5 // pred_region
      %s307 = ssub.s32 %s9, 2
      // Predicated region
      $region41: #{bn_conv2d_leaky.3} parent=39 // pred_check
        %p308 = pneg %p106
      $region42: #{bn_conv2d_leaky.3} parent=39 // pred_check_branch
        %310 = sbr.rel (%p308) target = $region44
      $region43: #{bn_conv2d_leaky.3} parent=39 // pred_region
        %s311 = smul.u32 16, %s15
        %p312 = scmp.lt.s32.totalorder %s311, 63
        %s313 = scalar_select %p312, %s311, 63
        %s314 = smul.addr %s313, 8
        %s315 = scalar_lea.vmem %s3, %s314
      $region44: #{bn_conv2d_leaky.3} parent=39 // pred_fallthru
        _
    $region40: #{bn_conv2d_leaky.3} parent=5 // pred_fallthru
      _
  $region6: #{bn_conv2d_leaky.3} parent=0 // loop_footer
    %s13 = sadd.s32 1, %s9
  $region7: #{bn_conv2d_leaky.3} parent=0 // loop_footer_branch
    %8 = sbr.rel target = $region3
  $region8: #{bn_conv2d_leaky.3} parent=0 // loop_exit
    _

// kernel: bn_conv2d_leaky.2
$region0: #{bn_conv2d_leaky.2}
  #allocation0 [shape = 'u32[]', space=smem, size = 0x4, offset = 0x4, fixed_abs, tag = 'smem constant byte address 0x4 - core index']
  #allocation1 [shape = 'u32[72,128]{1,0:T(1,128)}', space=vmem, size = 0x9000, scoped, tag = 'internal scratch']
  %s0 = inlined_call_operand.vmem [shape: bf16[512,128], index: 0, kind: input, shape index: {}]
  %s1 = inlined_call_operand.vmem [shape: bf16[128,128], index: 1, kind: input, shape index: {}]
  %s2 = inlined_call_operand.vmem [shape: f32[512,128], index: 2, kind: output, shape index: {0}]
  %s3 = inlined_call_operand.vmem [shape: f32[4,8,128], index: 3, kind: output, shape index: {1}]
  %s4 = inlined_call_operand.vmem [shape: f32[4,8,128], index: 4, kind: output, shape index: {2}]
  %5 = xla_tuple %s2, %s3, %s4
  %s6 = sld [smem:[#allocation0]]
  $region57: #{bn_conv2d_leaky.2} parent=0
    _
  %s8 = ssub.s32 1, %s6
  %s9 = scalar_select 0, %s8, %s6
  loop: start=0, step=1, limit=6
  $region2: #{bn_conv2d_leaky.2} parent=0 // loop_pre_header
    _
  $region3: #{bn_conv2d_leaky.2} parent=0 // loop_header
    %s11 = sphi 0, %s15
    %p12 = scmp.ge.s32.totalorder %s11, 6
    %s21 = sphi 0, %s23
    %s24 = sphi 0, %s21
    %s25 = sphi 0, %s24
    %s41 = sphi 0, %s25
    %s45 = sphi 0, %s45
    %s47 = sphi 0, %s45
    %s48 = sphi 0, %s47
    %s62 = sphi 0, %s48
    %s68 = sphi 0, %s70
    %s71 = sphi 0, %s68
    %s72 = sphi 0, %s71
    %s88 = sphi 0, %s72
    %s94 = sphi 0, %s96
    %s97 = sphi 0, %s94
    %s98 = sphi 0, %s97
    %s114 = sphi 0, %s98
    %s120 = sphi 0, %s122
    %s123 = sphi 0, %s120
    %s124 = sphi 0, %s123
    %s140 = sphi 0, %s124
  $region4: #{bn_conv2d_leaky.2} parent=0 // loop_header_branch
    %14 = sbr.rel (%p12) target = $region8
  $region5: #{bn_conv2d_leaky.2} parent=0 // loop_body
    %s16 = ssub.s32 %s11, 1
    %s17 = ssub.s32 %s11, 2
    %s18 = sadd.s32 %s11, 1
    %s19 = ssub.s32 %s11, %s18
    %p20 = scmp.eq.s32.totalorder %s19, 0
    %s22 = sadd.s32 %s21, 1
    %s23 = scalar_select %p20, %s21, %s22
    %p26 = pneg %p20
    %p27 = scmp.eq.s32.totalorder %s11, 3
    %p28 = por %p26, %p27
    %p29 = scmp.ne.s32.totalorder %s21, %s24
    %p30 = scmp.eq.s32.totalorder %s11, 0
    %p31 = por %p29, %p30
    %p32 = scmp.ne.s32.totalorder %s21, %s24
    %p33 = scmp.eq.s32.totalorder %s16, 3
    %p34 = por %p32, %p33
    %p35 = scmp.ne.s32.totalorder %s24, %s25
    %p36 = scmp.eq.s32.totalorder %s16, 0
    %p37 = por %p35, %p36
    %p38 = scmp.ne.s32.totalorder %s24, %s25
    %p39 = scmp.eq.s32.totalorder %s17, 3
    %p40 = por %p38, %p39
    %p42 = scmp.ne.s32.totalorder %s25, %s41
    %p43 = scmp.eq.s32.totalorder %s17, 0
    %p44 = por %p42, %p43
    %s46 = sadd.s32 %s45, 1
    %p49 = scmp.eq.s32.totalorder %s11, 3
    %p50 = scmp.ne.s32.totalorder %s45, %s47
    %p51 = scmp.eq.s32.totalorder %s11, 0
    %p52 = por %p50, %p51
    %p53 = scmp.ne.s32.totalorder %s45, %s47
    %p54 = scmp.eq.s32.totalorder %s16, 3
    %p55 = por %p53, %p54
    %p56 = scmp.ne.s32.totalorder %s47, %s48
    %p57 = scmp.eq.s32.totalorder %s16, 0
    %p58 = por %p56, %p57
    %p59 = scmp.ne.s32.totalorder %s47, %s48
    %p60 = scmp.eq.s32.totalorder %s17, 3
    %p61 = por %p59, %p60
    %p63 = scmp.ne.s32.totalorder %s48, %s62
    %p64 = scmp.eq.s32.totalorder %s17, 0
    %p65 = por %p63, %p64
    %s66 = ssub.s32 %s11, %s18
    %p67 = scmp.eq.s32.totalorder %s66, 0
    %s69 = sadd.s32 %s68, 1
    %s70 = scalar_select %p67, %s68, %s69
    %p73 = pneg %p67
    %p74 = scmp.eq.s32.totalorder %s11, 3
    %p75 = por %p73, %p74
    %p76 = scmp.ne.s32.totalorder %s68, %s71
    %p77 = scmp.eq.s32.totalorder %s11, 0
    %p78 = por %p76, %p77
    %p79 = scmp.ne.s32.totalorder %s68, %s71
    %p80 = scmp.eq.s32.totalorder %s16, 3
    %p81 = por %p79, %p80
    %p82 = scmp.ne.s32.totalorder %s71, %s72
    %p83 = scmp.eq.s32.totalorder %s16, 0
    %p84 = por %p82, %p83
    %p85 = scmp.ne.s32.totalorder %s71, %s72
    %p86 = scmp.eq.s32.totalorder %s17, 3
    %p87 = por %p85, %p86
    %p89 = scmp.ne.s32.totalorder %s72, %s88
    %p90 = scmp.eq.s32.totalorder %s17, 0
    %p91 = por %p89, %p90
    %s92 = ssub.s32 %s11, %s18
    %p93 = scmp.eq.s32.totalorder %s92, 0
    %s95 = sadd.s32 %s94, 1
    %s96 = scalar_select %p93, %s94, %s95
    %p99 = pneg %p93
    %p100 = scmp.eq.s32.totalorder %s11, 3
    %p101 = por %p99, %p100
    %p102 = scmp.ne.s32.totalorder %s94, %s97
    %p103 = scmp.eq.s32.totalorder %s11, 0
    %p104 = por %p102, %p103
    %p105 = scmp.ne.s32.totalorder %s94, %s97
    %p106 = scmp.eq.s32.totalorder %s16, 3
    %p107 = por %p105, %p106
    %p108 = scmp.ne.s32.totalorder %s97, %s98
    %p109 = scmp.eq.s32.totalorder %s16, 0
    %p110 = por %p108, %p109
    %p111 = scmp.ne.s32.totalorder %s97, %s98
    %p112 = scmp.eq.s32.totalorder %s17, 3
    %p113 = por %p111, %p112
    %p115 = scmp.ne.s32.totalorder %s98, %s114
    %p116 = scmp.eq.s32.totalorder %s17, 0
    %p117 = por %p115, %p116
    %s118 = ssub.s32 %s11, %s18
    %p119 = scmp.eq.s32.totalorder %s118, 0
    %s121 = sadd.s32 %s120, 1
    %s122 = scalar_select %p119, %s120, %s121
    %p125 = pneg %p119
    %p126 = scmp.eq.s32.totalorder %s11, 3
    %p127 = por %p125, %p126
    %p128 = scmp.ne.s32.totalorder %s120, %s123
    %p129 = scmp.eq.s32.totalorder %s11, 0
    %p130 = por %p128, %p129
    %p131 = scmp.ne.s32.totalorder %s120, %s123
    %p132 = scmp.eq.s32.totalorder %s16, 3
    %p133 = por %p131, %p132
    %p134 = scmp.ne.s32.totalorder %s123, %s124
    %p135 = scmp.eq.s32.totalorder %s16, 0
    %p136 = por %p134, %p135
    %p137 = scmp.ne.s32.totalorder %s123, %s124
    %p138 = scmp.eq.s32.totalorder %s17, 3
    %p139 = por %p137, %p138
    %p141 = scmp.ne.s32.totalorder %s124, %s140
    %p142 = scmp.eq.s32.totalorder %s17, 0
    %p143 = por %p141, %p142
    %p144 = scmp.le.s32.totalorder 1, %s11
    %p145 = scmp.lt.s32.totalorder %s11, 5
    %p146 = pnand %p144, %p145
    %p147 = pneg %p146
    // Predicated region
    $region9: #{bn_conv2d_leaky.2} parent=5 // pred_check
      _
    $region10: #{bn_conv2d_leaky.2} parent=5 // pred_check_branch
      %149 = sbr.rel (%p146) target = $region12
    $region11: #{bn_conv2d_leaky.2} parent=5 // pred_region
      %s150 = ssub.s32 %s11, 1
      // Predicated region
      $region13: #{bn_conv2d_leaky.2} parent=11 // pred_check
        %p151 = pneg %p58
      $region14: #{bn_conv2d_leaky.2} parent=11 // pred_check_branch
        %153 = sbr.rel (%p151) target = $region16
      $region15: #{bn_conv2d_leaky.2} parent=11 // pred_region
        _
      $region16: #{bn_conv2d_leaky.2} parent=11 // pred_fallthru
        _
    $region12: #{bn_conv2d_leaky.2} parent=5 // pred_fallthru
      _
    %p154 = scmp.lt.s32.totalorder %s11, 4
    // Predicated region
    $region17: #{bn_conv2d_leaky.2} parent=5 // pred_check
      %p155 = pneg %p154
    $region18: #{bn_conv2d_leaky.2} parent=5 // pred_check_branch
      %157 = sbr.rel (%p155) target = $region20
    $region19: #{bn_conv2d_leaky.2} parent=5 // pred_region
      // Predicated region
      $region21: #{bn_conv2d_leaky.2} parent=19 // pred_check
        %p158 = pneg %p31
      $region22: #{bn_conv2d_leaky.2} parent=19 // pred_check_branch
        %160 = sbr.rel (%p158) target = $region24
      $region23: #{bn_conv2d_leaky.2} parent=19 // pred_region
        %s161 = smul.u32 16, %s11
        %p162 = scmp.lt.s32.totalorder %s161, 63
        %s163 = scalar_select %p162, %s161, 63
        %s164 = smul.addr %s163, 4
        %s165 = scalar_lea.vmem %s0, %s164
        %s166 = smul.u32 16, %s11
      $region24: #{bn_conv2d_leaky.2} parent=19 // pred_fallthru
        _
    $region20: #{bn_conv2d_leaky.2} parent=5 // pred_fallthru
      _
    %p167 = scmp.le.s32.totalorder 1, %s11
    %p168 = scmp.lt.s32.totalorder %s11, 5
    %p169 = pnand %p167, %p168
    %p170 = pneg %p169
    // Predicated region
    $region25: #{bn_conv2d_leaky.2} parent=5 // pred_check
      _
    $region26: #{bn_conv2d_leaky.2} parent=5 // pred_check_branch
      %172 = sbr.rel (%p169) target = $region28
    $region27: #{bn_conv2d_leaky.2} parent=5 // pred_region
      %s173 = ssub.s32 %s11, 1
      %s174 = smul.u32 16, %s16
      %p175 = scmp.lt.s32.totalorder %s174, 63
      %s176 = scalar_select %p175, %s174, 63
      %s177 = smul.addr %s176, 4
      %s178 = scalar_lea.vmem %s0, %s177
      %p179 = pneg %p37
      %p180 = pneg %p34
      %p181 = pneg %p58
      %p182 = pneg %p55
      %p183 = pneg %p84
      %p184 = pneg %p81
      %s185 = smul.u32 16, %s16
      %p186 = scmp.lt.s32.totalorder %s185, 63
      %s187 = scalar_select %p186, %s185, 63
      %s188 = smul.addr %s187, 8
      %s189 = scalar_lea.vmem %s2, %s188
      %p190 = pneg %p110
      %p191 = pneg %p107
      %p192 = scmp.lt.s32.totalorder %s16, 3
      %s193 = scalar_select %p192, %s16, 3
      %s194 = smul.addr %s193, 8
      %s195 = scalar_lea.vmem %s3, %s194
      %p196 = pneg %p136
      %p197 = pneg %p133
      %p198 = scmp.lt.s32.totalorder %s16, 3
      %s199 = scalar_select %p198, %s16, 3
      %s200 = smul.addr %s199, 8
      %s201 = scalar_lea.vmem %s4, %s200
      %s202 = smul.u32 16, %s16
      %p203 = scmp.lt.s32.totalorder %s202, 63
      %s204 = scalar_select %p203, %s202, 63
      %s205 = smul.addr %s204, 4
      %s206 = scalar_lea.vmem %s0, %s205
      %s207 = smul.u32 16, %s16
      %s208 = smul.u32 16, %s16
      %p209 = scmp.lt.s32.totalorder %s208, 63
      %s210 = scalar_select %p209, %s208, 63
      %s211 = smul.addr %s210, 8
      %s212 = scalar_lea.vmem %s2, %s211
      %s213 = smul.u32 16, %s16
      %p214 = scmp.lt.s32.totalorder %s16, 3
      %s215 = scalar_select %p214, %s16, 3
      %s216 = smul.addr %s215, 8
      %s217 = scalar_lea.vmem %s3, %s216
      %p218 = scmp.lt.s32.totalorder %s16, 3
      %s219 = scalar_select %p218, %s16, 3
      %s220 = smul.addr %s219, 8
      %s221 = scalar_lea.vmem %s4, %s220
      %v222 = vld [vmem:[%s206] sm:$0xf]
      %v223 = vld [vmem:[%s206 + $0x4] sm:$0xf]
      %v224 = vld [vmem:[%s206 + $0x8] sm:$0xf]
      %v225 = vld [vmem:[%s206 + $0xc] sm:$0xf]
      %v226 = vld [vmem:[%s206 + $0x10] sm:$0xf]
      %v227 = vld [vmem:[%s206 + $0x14] sm:$0xf]
      %v228 = vld [vmem:[%s206 + $0x18] sm:$0xf]
      %v229 = vld [vmem:[%s206 + $0x1c] sm:$0xf]
      %v230 = vld [vmem:[%s206 + $0x20] sm:$0xf]
      %v231 = vld [vmem:[%s206 + $0x24] sm:$0xf]
      %v232 = vld [vmem:[%s206 + $0x28] sm:$0xf]
      %v233 = vld [vmem:[%s206 + $0x2c] sm:$0xf]
      %v234 = vld [vmem:[%s206 + $0x30] sm:$0xf]
      %v235 = vld [vmem:[%s206 + $0x34] sm:$0xf]
      %v236 = vld [vmem:[%s206 + $0x38] sm:$0xf]
      %v237 = vld [vmem:[%s206 + $0x3c] sm:$0xf]
      %v238 = vld [vmem:[%s1] sm:$0xf]
      %v239 = vld [vmem:[%s1 + $0x4] sm:$0xf]
      %v240 = vld [vmem:[%s1 + $0x8] sm:$0xf]
      %v241 = vld [vmem:[%s1 + $0xc] sm:$0xf]
      %v242 = vld [vmem:[%s1 + $0x10] sm:$0xf]
      %v243 = vld [vmem:[%s1 + $0x14] sm:$0xf]
      %v244 = vld [vmem:[%s1 + $0x18] sm:$0xf]
      %v245 = vld [vmem:[%s1 + $0x1c] sm:$0xf]
      %v246 = vld [vmem:[%s1 + $0x20] sm:$0xf]
      %v247 = vld [vmem:[%s1 + $0x24] sm:$0xf]
      %v248 = vld [vmem:[%s1 + $0x28] sm:$0xf]
      %v249 = vld [vmem:[%s1 + $0x2c] sm:$0xf]
      %v250 = vld [vmem:[%s1 + $0x30] sm:$0xf]
      %v251 = vld [vmem:[%s1 + $0x34] sm:$0xf]
      %v252 = vld [vmem:[%s1 + $0x38] sm:$0xf]
      %v253 = vld [vmem:[%s1 + $0x3c] sm:$0xf]
      %v270 = vunpack.c.l.b16 %v222
      %v271 = vunpack.c.l.b16 %v223
      %v272 = vunpack.c.l.b16 %v224
      %v273 = vunpack.c.l.b16 %v225
      %v274 = vunpack.c.l.b16 %v226
      %v275 = vunpack.c.l.b16 %v227
      %v276 = vunpack.c.l.b16 %v228
      %v277 = vunpack.c.l.b16 %v229
      %v278 = vunpack.c.l.b16 %v230
      %v279 = vunpack.c.l.b16 %v231
      %v280 = vunpack.c.l.b16 %v232
      %v281 = vunpack.c.l.b16 %v233
      %v282 = vunpack.c.l.b16 %v234
      %v283 = vunpack.c.l.b16 %v235
      %v284 = vunpack.c.l.b16 %v236
      %v285 = vunpack.c.l.b16 %v237
      %v286 = vpack.c.b16 %v271, %v270
      %v287 = vpack.c.b16 %v273, %v272
      %v288 = vpack.c.b16 %v275, %v274
      %v289 = vpack.c.b16 %v277, %v276
      %v290 = vpack.c.b16 %v279, %v278
      %v291 = vpack.c.b16 %v281, %v280
      %v292 = vpack.c.b16 %v283, %v282
      %v293 = vpack.c.b16 %v285, %v284
      %v318 = vunpack.c.l.b16 %v238
      %v319 = vunpack.c.l.b16 %v239
      %v320 = vunpack.c.l.b16 %v240
      %v321 = vunpack.c.l.b16 %v241
      %v322 = vunpack.c.l.b16 %v242
      %v323 = vunpack.c.l.b16 %v243
      %v324 = vunpack.c.l.b16 %v244
      %v325 = vunpack.c.l.b16 %v245
      %v326 = vunpack.c.l.b16 %v246
      %v327 = vunpack.c.l.b16 %v247
      %v328 = vunpack.c.l.b16 %v248
      %v329 = vunpack.c.l.b16 %v249
      %v330 = vunpack.c.l.b16 %v250
      %v331 = vunpack.c.l.b16 %v251
      %v332 = vunpack.c.l.b16 %v252
      %v333 = vunpack.c.l.b16 %v253
      %v334 = vpack.c.b16 %v319, %v318
      %v335 = vpack.c.b16 %v321, %v320
      %v336 = vpack.c.b16 %v323, %v322
      %v337 = vpack.c.b16 %v325, %v324
      %v338 = vpack.c.b16 %v327, %v326
      %v339 = vpack.c.b16 %v329, %v328
      %v340 = vpack.c.b16 %v331, %v330
      %v341 = vpack.c.b16 %v333, %v332
      %350 = vmatpush.bf16.msra.mxu0 %v341
      %351 = vmatpush.bf16.msra.mxu0 %v340
      %352 = vmatpush.bf16.msra.mxu0 %v339
      %353 = vmatpush.bf16.msra.mxu0 %v338
      %354 = vmatpush.bf16.msra.mxu0 %v337
      %355 = vmatpush.bf16.msra.mxu0 %v336
      %356 = vmatpush.bf16.msra.mxu0 %v335
      %357 = vmatpush.bf16.msra.mxu0 %v334
      %358 = vmatmul.bf16.gmra.mxu0 %v286
      %v359 = vpop.f32.mrf.mxu0
      %v360 = vadd.f32 0.0, %v359
      %v361 = vpop.f32.mrf.mxu0
      %v362 = vadd.f32 0.0, %v361
      %363 = vmatmul.bf16.gmra.mxu0 %v287
      %v364 = vpop.f32.mrf.mxu0
      %v365 = vadd.f32 0.0, %v364
      %v366 = vpop.f32.mrf.mxu0
      %v367 = vadd.f32 0.0, %v366
      %368 = vmatmul.bf16.gmra.mxu0 %v288
      %v369 = vpop.f32.mrf.mxu0
      %v370 = vadd.f32 0.0, %v369
      %v371 = vpop.f32.mrf.mxu0
      %v372 = vadd.f32 0.0, %v371
      %373 = vmatmul.bf16.gmra.mxu0 %v289
      %v374 = vpop.f32.mrf.mxu0
      %v375 = vadd.f32 0.0, %v374
      %v376 = vpop.f32.mrf.mxu0
      %v377 = vadd.f32 0.0, %v376
      %378 = vmatmul.bf16.gmra.mxu0 %v290
      %v379 = vpop.f32.mrf.mxu0
      %v380 = vadd.f32 0.0, %v379
      %v381 = vpop.f32.mrf.mxu0
      %v382 = vadd.f32 0.0, %v381
      %383 = vmatmul.bf16.gmra.mxu0 %v291
      %v384 = vpop.f32.mrf.mxu0
      %v385 = vadd.f32 0.0, %v384
      %v386 = vpop.f32.mrf.mxu0
      %v387 = vadd.f32 0.0, %v386
      %388 = vmatmul.bf16.gmra.mxu0 %v292
      %v389 = vpop.f32.mrf.mxu0
      %v390 = vadd.f32 0.0, %v389
      %v391 = vpop.f32.mrf.mxu0
      %v392 = vadd.f32 0.0, %v391
      %393 = vmatmul.bf16.gmra.mxu0 %v293
      %v394 = vpop.f32.mrf.mxu0
      %v395 = vadd.f32 0.0, %v394
      %v396 = vpop.f32.mrf.mxu0
      %v397 = vadd.f32 0.0, %v396
      %398 = vdwg.mxu0
      %399 = vst [vmem:[%s212] sm:$0xff] %v360
      %400 = vst [vmem:[%s212 + $0x8] sm:$0xff] %v362
      %401 = vst [vmem:[%s212 + $0x10] sm:$0xff] %v365
      %402 = vst [vmem:[%s212 + $0x18] sm:$0xff] %v367
      %403 = vst [vmem:[%s212 + $0x20] sm:$0xff] %v370
      %404 = vst [vmem:[%s212 + $0x28] sm:$0xff] %v372
      %405 = vst [vmem:[%s212 + $0x30] sm:$0xff] %v375
      %406 = vst [vmem:[%s212 + $0x38] sm:$0xff] %v377
      %407 = vst [vmem:[%s212 + $0x40] sm:$0xff] %v380
      %408 = vst [vmem:[%s212 + $0x48] sm:$0xff] %v382
      %409 = vst [vmem:[%s212 + $0x50] sm:$0xff] %v385
      %410 = vst [vmem:[%s212 + $0x58] sm:$0xff] %v387
      %411 = vst [vmem:[%s212 + $0x60] sm:$0xff] %v390
      %412 = vst [vmem:[%s212 + $0x68] sm:$0xff] %v392
      %413 = vst [vmem:[%s212 + $0x70] sm:$0xff] %v395
      %414 = vst [vmem:[%s212 + $0x78] sm:$0xff] %v397
      %v415 = vadd.f32 %v360, %v362
      %v416 = vadd.f32 %v415, %v365
      %v417 = vadd.f32 %v416, %v367
      %v418 = vadd.f32 %v417, %v370
      %v419 = vadd.f32 %v418, %v372
      %v420 = vadd.f32 %v419, %v375
      %v421 = vadd.f32 %v420, %v377
      %v422 = vadd.f32 %v421, %v380
      %v423 = vadd.f32 %v422, %v382
      %v424 = vadd.f32 %v423, %v385
      %v425 = vadd.f32 %v424, %v387
      %v426 = vadd.f32 %v425, %v390
      %v427 = vadd.f32 %v426, %v392
      %v428 = vadd.f32 %v427, %v395
      %v429 = vadd.f32 %v428, %v397
      %v430 = vrot.slane %v429, 4
      %v431 = vadd.f32 %v429, %v430
      %v432 = vrot.slane %v431, 2
      %v433 = vadd.f32 %v431, %v432
      %v434 = vrot.slane %v433, 1
      %v435 = vadd.f32 %v433, %v434
      %v436 = vmul.f32 %v360, %v360
      %v437 = vmul.f32 %v362, %v362
      %v438 = vmul.f32 %v365, %v365
      %v439 = vmul.f32 %v367, %v367
      %v440 = vmul.f32 %v370, %v370
      %v441 = vmul.f32 %v372, %v372
      %v442 = vmul.f32 %v375, %v375
      %v443 = vmul.f32 %v377, %v377
      %v444 = vmul.f32 %v380, %v380
      %v445 = vmul.f32 %v382, %v382
      %v446 = vmul.f32 %v385, %v385
      %v447 = vmul.f32 %v387, %v387
      %v448 = vmul.f32 %v390, %v390
      %v449 = vmul.f32 %v392, %v392
      %v450 = vmul.f32 %v395, %v395
      %v451 = vmul.f32 %v397, %v397
      %v452 = vadd.f32 %v436, %v437
      %v453 = vadd.f32 %v452, %v438
      %v454 = vadd.f32 %v453, %v439
      %v455 = vadd.f32 %v454, %v440
      %v456 = vadd.f32 %v455, %v441
      %v457 = vadd.f32 %v456, %v442
      %v458 = vadd.f32 %v457, %v443
      %v459 = vadd.f32 %v458, %v444
      %v460 = vadd.f32 %v459, %v445
      %v461 = vadd.f32 %v460, %v446
      %v462 = vadd.f32 %v461, %v447
      %v463 = vadd.f32 %v462, %v448
      %v464 = vadd.f32 %v463, %v449
      %v465 = vadd.f32 %v464, %v450
      %v466 = vadd.f32 %v465, %v451
      %v467 = vrot.slane %v466, 4
      %v468 = vadd.f32 %v466, %v467
      %v469 = vrot.slane %v468, 2
      %v470 = vadd.f32 %v468, %v469
      %v471 = vrot.slane %v470, 1
      %v472 = vadd.f32 %v470, %v471
      %473 = vst [vmem:[%s217] sm:$0xff] %v435
      %474 = vst [vmem:[%s221] sm:$0xff] %v472
      %s475 = smul.u32 16, %s16
      %p476 = scmp.lt.s32.totalorder %s475, 63
      %s477 = scalar_select %p476, %s475, 63
      %s478 = smul.addr %s477, 8
      %s479 = scalar_lea.vmem %s2, %s478
      %p480 = scmp.lt.s32.totalorder %s16, 3
      %s481 = scalar_select %p480, %s16, 3
      %s482 = smul.addr %s481, 8
      %s483 = scalar_lea.vmem %s3, %s482
      %p484 = scmp.lt.s32.totalorder %s16, 3
      %s485 = scalar_select %p484, %s16, 3
      %s486 = smul.addr %s485, 8
      %s487 = scalar_lea.vmem %s4, %s486
      // Predicated region
      $region29: #{bn_conv2d_leaky.2} parent=27 // pred_check
        %p488 = pneg %p81
      $region30: #{bn_conv2d_leaky.2} parent=27 // pred_check_branch
        %490 = sbr.rel (%p488) target = $region32
      $region31: #{bn_conv2d_leaky.2} parent=27 // pred_region
        %s491 = smul.u32 16, %s16
      $region32: #{bn_conv2d_leaky.2} parent=27 // pred_fallthru
        _
      // Predicated region
      $region33: #{bn_conv2d_leaky.2} parent=27 // pred_check
        %p492 = pneg %p107
      $region34: #{bn_conv2d_leaky.2} parent=27 // pred_check_branch
        %494 = sbr.rel (%p492) target = $region36
      $region35: #{bn_conv2d_leaky.2} parent=27 // pred_region
        _
      $region36: #{bn_conv2d_leaky.2} parent=27 // pred_fallthru
        _
      // Predicated region
      $region37: #{bn_conv2d_leaky.2} parent=27 // pred_check
        %p495 = pneg %p133
      $region38: #{bn_conv2d_leaky.2} parent=27 // pred_check_branch
        %497 = sbr.rel (%p495) target = $region40
      $region39: #{bn_conv2d_leaky.2} parent=27 // pred_region
        _
      $region40: #{bn_conv2d_leaky.2} parent=27 // pred_fallthru
        _
    $region28: #{bn_conv2d_leaky.2} parent=5 // pred_fallthru
      _
    %p498 = scmp.le.s32.totalorder 2, %s11
    // Predicated region
    $region41: #{bn_conv2d_leaky.2} parent=5 // pred_check
      %p499 = pneg %p498
    $region42: #{bn_conv2d_leaky.2} parent=5 // pred_check_branch
      %501 = sbr.rel (%p499) target = $region44
    $region43: #{bn_conv2d_leaky.2} parent=5 // pred_region
      %s502 = ssub.s32 %s11, 2
      // Predicated region
      $region45: #{bn_conv2d_leaky.2} parent=43 // pred_check
        %p503 = pneg %p87
      $region46: #{bn_conv2d_leaky.2} parent=43 // pred_check_branch
        %505 = sbr.rel (%p503) target = $region48
      $region47: #{bn_conv2d_leaky.2} parent=43 // pred_region
        %s506 = smul.u32 16, %s17
        %p507 = scmp.lt.s32.totalorder %s506, 63
        %s508 = scalar_select %p507, %s506, 63
        %s509 = smul.addr %s508, 8
        %s510 = scalar_lea.vmem %s2, %s509
      $region48: #{bn_conv2d_leaky.2} parent=43 // pred_fallthru
        _
      // Predicated region
      $region49: #{bn_conv2d_leaky.2} parent=43 // pred_check
        %p511 = pneg %p113
      $region50: #{bn_conv2d_leaky.2} parent=43 // pred_check_branch
        %513 = sbr.rel (%p511) target = $region52
      $region51: #{bn_conv2d_leaky.2} parent=43 // pred_region
        %p514 = scmp.lt.s32.totalorder %s17, 3
        %s515 = scalar_select %p514, %s17, 3
        %s516 = smul.addr %s515, 8
        %s517 = scalar_lea.vmem %s3, %s516
      $region52: #{bn_conv2d_leaky.2} parent=43 // pred_fallthru
        _
      // Predicated region
      $region53: #{bn_conv2d_leaky.2} parent=43 // pred_check
        %p518 = pneg %p139
      $region54: #{bn_conv2d_leaky.2} parent=43 // pred_check_branch
        %520 = sbr.rel (%p518) target = $region56
      $region55: #{bn_conv2d_leaky.2} parent=43 // pred_region
        %p521 = scmp.lt.s32.totalorder %s17, 3
        %s522 = scalar_select %p521, %s17, 3
        %s523 = smul.addr %s522, 8
        %s524 = scalar_lea.vmem %s4, %s523
      $region56: #{bn_conv2d_leaky.2} parent=43 // pred_fallthru
        _
    $region44: #{bn_conv2d_leaky.2} parent=5 // pred_fallthru
      _
  $region6: #{bn_conv2d_leaky.2} parent=0 // loop_footer
    %s15 = sadd.s32 1, %s11
  $region7: #{bn_conv2d_leaky.2} parent=0 // loop_footer_branch
    %10 = sbr.rel target = $region3
  $region8: #{bn_conv2d_leaky.2} parent=0 // loop_exit
    _

</llo_original>
